<compile_context>
chip_gen: v6e
topology: v6e:2x2x1
jax: 0.10.0
libtpu: 0.0.40
codegen_flags: <defaults>
</compile_context>

<pallas_src>
import functools

import jax
import jax.numpy as jnp
from jax.experimental import pallas as pl
from jax.experimental.pallas import tpu as pltpu

_NEG = -1e30          # fill value for padded vocab columns (safe under logsumexp)
_LANE = 128           # TPU lane width: pad vocab to a multiple of this
_VMEM_LIMIT = 32 * 1024 * 1024


def _round_up(x, m):
    return (x + m - 1) // m * m


def _pick_tile(n, candidates):
    for t in candidates:
        if n % t == 0:
            return t
    return n


# -------------------------- fused kernels ----------------------------------- #

def _build_table(emb_ref, w_ref, b_ref, table_sc):
    """table[i, j] = sum_d emb[i, d] * w[j, d] + b[j]  (bf16 x bf16 -> f32 acc)."""
    acc = jax.lax.dot_general(
        emb_ref[...], w_ref[...],
        dimension_numbers=(((1,), (1,)), ((), ())),    # contract on D, no transpose copy
        preferred_element_type=jnp.float32)
    table_sc[...] = acc + b_ref[...]                   # bias add in f32 (VPU)


def _fused_logits_kernel(idx_sref, emb_ref, w_ref, b_ref, logits_ref, table_sc, *, tn):
    """Build the table once (step 0), then gather rows for this token tile."""
    @pl.when(pl.program_id(0) == 0)
    def _():
        _build_table(emb_ref, w_ref, b_ref, table_sc)

    base = pl.program_id(0) * tn
    for r in range(tn):                                # static unroll (tn kept small)
        tok = idx_sref[base + r]                       # SMEM scalar read
        logits_ref[pl.ds(r, 1), :] = table_sc[pl.ds(tok, 1), :]


def _fused_ce_kernel(idx_sref, emb_ref, w_ref, b_ref, tgt_ref,
                     logits_ref, rowloss_ref, table_sc, *, tn):
    """Table build + row gather + fused cross-entropy epilogue (per-row lse - picked)."""
    @pl.when(pl.program_id(0) == 0)
    def _():
        _build_table(emb_ref, w_ref, b_ref, table_sc)

    base = pl.program_id(0) * tn
    for r in range(tn):
        tok = idx_sref[base + r]
        logits_ref[pl.ds(r, 1), :] = table_sc[pl.ds(tok, 1), :]

    # Epilogue: all elementwise/VPU math in f32 (v5e-safe).
    lg = logits_ref[...]                                              # (tn, Vp) f32
    m = jnp.max(lg, axis=-1, keepdims=True)                           # (tn, 1)
    lse = m + jnp.log(jnp.sum(jnp.exp(lg - m), axis=-1, keepdims=True))
    col = jax.lax.broadcasted_iota(jnp.int32, lg.shape, 1)            # (tn, Vp)
    tgt = tgt_ref[...]                                                # (tn, 1) int32
    picked = jnp.sum(jnp.where(col == tgt, lg, 0.0), axis=-1, keepdims=True)
    rowloss_ref[...] = lse - picked                                   # (tn, 1)


# ------------------------------- JAX wrapper -------------------------------- #

@functools.partial(jax.jit, static_argnames=("with_targets",))
def bigram_forward(idx, emb, w, b, targets=None, with_targets=False):
    B, T = idx.shape
    V, D = emb.shape
    N = B * T
    Vp = _round_up(V, _LANE)

    # One-time padding/casting glue: bf16 matmul operands, f32 bias.
    emb_p = jnp.pad(emb.astype(jnp.bfloat16), ((0, Vp - V), (0, 0)))
    w_p = jnp.pad(w.astype(jnp.bfloat16), ((0, Vp - V), (0, 0)))
    b_p = jnp.pad(b.astype(jnp.float32), (0, Vp - V),
                  constant_values=_NEG).reshape(1, Vp)

    idx_flat = idx.reshape(N).astype(jnp.int32)
    tn = _pick_tile(N, (32, 16, 8))    # row tile (small: gather loop is unrolled)

    cparams = pltpu.CompilerParams(
        # Grid axis is "arbitrary": step 0 initializes the VMEM table scratch
        # that later steps read (sequential dependency).
        dimension_semantics=("arbitrary",),
        vmem_limit_bytes=_VMEM_LIMIT)

    if not with_targets:
        grid_spec = pltpu.PrefetchScalarGridSpec(
            num_scalar_prefetch=1,
            grid=(N // tn,),
            in_specs=[
                pl.BlockSpec((Vp, D), lambda i, idx_ref: (0, 0)),     # Emb (resident)
                pl.BlockSpec((Vp, D), lambda i, idx_ref: (0, 0)),     # W   (resident)
                pl.BlockSpec((1, Vp), lambda i, idx_ref: (0, 0)),     # bias
            ],
            out_specs=pl.BlockSpec((tn, Vp), lambda i, idx_ref: (i, 0)),
            scratch_shapes=[pltpu.VMEM((Vp, Vp), jnp.float32)],       # logits table
        )
        logits_pad = pl.pallas_call(
            functools.partial(_fused_logits_kernel, tn=tn),
            grid_spec=grid_spec,
            out_shape=jax.ShapeDtypeStruct((N, Vp), jnp.float32),
            compiler_params=cparams,
        )(idx_flat, emb_p, w_p, b_p)
        return logits_pad[:, :V].reshape(B, T, V), None

    tgt2d = targets.reshape(N, 1).astype(jnp.int32)
    grid_spec = pltpu.PrefetchScalarGridSpec(
        num_scalar_prefetch=1,
        grid=(N // tn,),
        in_specs=[
            pl.BlockSpec((Vp, D), lambda i, idx_ref: (0, 0)),         # Emb (resident)
            pl.BlockSpec((Vp, D), lambda i, idx_ref: (0, 0)),         # W   (resident)
            pl.BlockSpec((1, Vp), lambda i, idx_ref: (0, 0)),         # bias
            pl.BlockSpec((tn, 1), lambda i, idx_ref: (i, 0)),         # targets tile
        ],
        out_specs=(
            pl.BlockSpec((tn, Vp), lambda i, idx_ref: (i, 0)),        # logits tile
            pl.BlockSpec((tn, 1), lambda i, idx_ref: (i, 0)),         # per-row CE partials
        ),
        scratch_shapes=[pltpu.VMEM((Vp, Vp), jnp.float32)],           # logits table
    )
    logits_pad, rowloss = pl.pallas_call(
        functools.partial(_fused_ce_kernel, tn=tn),
        grid_spec=grid_spec,
        out_shape=(
            jax.ShapeDtypeStruct((N, Vp), jnp.float32),
            jax.ShapeDtypeStruct((N, 1), jnp.float32),
        ),
        compiler_params=cparams,
    )(idx_flat, emb_p, w_p, b_p, tgt2d)

    loss = jnp.sum(rowloss) / jnp.float32(N)          # tiny mean over N in the wrapper
    # PyTorch returns logits already viewed as (B*T, C) when targets are given.
    return logits_pad[:, :V], loss


# ---------------------------------- main ------------------------------------ #

if __name__ == "__main__":
    embedding_dim = 32
    # `chars = sorted(list(set(text)))` from the original script, built in-script:
    text = "hello tpu pallas bigram language model kernel"
    chars = sorted(list(set(text)))
    vocab_size = len(chars)

    B, T = 2, 8

    key = jax.random.PRNGKey(0)
    k_emb, k_w, k_b, k_idx, k_tgt = jax.random.split(key, 5)

    # nn.Embedding init ~ N(0, 1); nn.Linear init ~ U(-1/sqrt(D), 1/sqrt(D))
    emb = jax.random.normal(k_emb, (vocab_size, embedding_dim), dtype=jnp.float32)
    bound = 1.0 / (embedding_dim ** 0.5)
    w = jax.random.uniform(k_w, (vocab_size, embedding_dim), jnp.float32, -bound, bound)
    b = jax.random.uniform(k_b, (vocab_size,), jnp.float32, -bound, bound)

    idx = jax.random.randint(k_idx, (B, T), 0, vocab_size, dtype=jnp.int32)
    targets = jax.random.randint(k_tgt, (B, T), 0, vocab_size, dtype=jnp.int32)

    # targets=None path: logits (B, T, V), loss None
    logits_btv, loss_none = bigram_forward(idx, emb, w, b, with_targets=False)
    logits_btv = jax.block_until_ready(logits_btv)
    assert logits_btv.shape == (B, T, vocab_size)
    assert loss_none is None

    # targets path: logits (B*T, V), scalar loss
    logits_flat, loss = bigram_forward(idx, emb, w, b, targets, with_targets=True)
    logits_flat = jax.block_until_ready(logits_flat)
    loss = jax.block_until_ready(loss)
    assert logits_flat.shape == (B * T, vocab_size)
    assert loss.shape == ()

    # Reference: same bf16 operand rounding as the kernel, f32 accumulation.
    emb_bf = emb.astype(jnp.bfloat16).astype(jnp.float32)
    w_bf = w.astype(jnp.bfloat16).astype(jnp.float32)
    ref_table = jnp.dot(emb_bf, w_bf.T, precision=jax.lax.Precision.HIGHEST) + b
    ref_logits = ref_table[idx]                       # (B, T, V)
    ref_flat = ref_logits.reshape(B * T, vocab_size)
    ref_loss = jnp.mean(
        jax.nn.logsumexp(ref_flat, axis=-1)
        - jnp.take_along_axis(ref_flat, targets.reshape(-1, 1), axis=-1)[:, 0])

    assert jnp.allclose(logits_btv, ref_logits, atol=1e-3, rtol=1e-3)
    assert jnp.allclose(logits_flat, ref_flat, atol=1e-3, rtol=1e-3)
    assert jnp.allclose(loss, ref_loss, atol=1e-3, rtol=1e-3)

    print("KERNEL_OK")
</pallas_src>

<mosaic_0001>
module attributes {stable_mosaic.version = 11 : i64} {
  func.func @_fused_logits_kernel(%arg0: i32, %arg1: memref<16xi32, #tpu.memory_space<smem>>, %arg2: memref<128x32xbf16, #tpu.memory_space<vmem>>, %arg3: memref<128x32xbf16, #tpu.memory_space<vmem>>, %arg4: memref<1x128xf32, #tpu.memory_space<vmem>>, %arg5: memref<16x128xf32, #tpu.memory_space<vmem>>, %arg6: memref<128x128xf32, #tpu.memory_space<vmem>>) attributes {dimension_semantics = [#tpu.dimension_semantics<arbitrary>], iteration_bounds = array<i64: 1>, scalar_prefetch = 1 : i64, scratch_operands = 1 : i64, tpu.core_type = #tpu.core_type<tc>, window_params = [{pipeline_mode = #tpu.pipeline_mode<synchronous>, transform_indices = @transform_0, window_bounds = array<i64: 128, 32>}, {pipeline_mode = #tpu.pipeline_mode<synchronous>, transform_indices = @transform_1, window_bounds = array<i64: 128, 32>}, {pipeline_mode = #tpu.pipeline_mode<synchronous>, transform_indices = @transform_2, window_bounds = array<i64: 1, 128>}, {transform_indices = @transform_3, window_bounds = array<i64: 16, 128>}]} {
    %c0_i32 = arith.constant 0 : i32
    %0 = arith.cmpi eq, %arg0, %c0_i32 : i32
    %1 = arith.extui %0 : i1 to i32
    %c0_i32_0 = arith.constant 0 : i32
    %2 = arith.cmpi ne, %1, %c0_i32_0 : i32
    scf.if %2 {
      %c0_34 = arith.constant 0 : index
      %c0_35 = arith.constant 0 : index
      %100 = vector.load %arg2[%c0_34, %c0_35] : memref<128x32xbf16, #tpu.memory_space<vmem>>, vector<128x32xbf16>
      %c0_36 = arith.constant 0 : index
      %c0_37 = arith.constant 0 : index
      %101 = vector.load %arg3[%c0_36, %c0_37] : memref<128x32xbf16, #tpu.memory_space<vmem>>, vector<128x32xbf16>
      %cst = arith.constant dense<0.000000e+00> : vector<128x128xf32>
      %102 = tpu.matmul %100, %101, %cst {dimension_numbers = #tpu.dot_dimension_numbers<[1], [1], [0], [0], [0, 0, 1, 0], [], []>} : vector<128x32xbf16>, vector<128x32xbf16>, vector<128x128xf32> -> vector<128x128xf32>
      %c0_38 = arith.constant 0 : index
      %c0_39 = arith.constant 0 : index
      %103 = vector.load %arg4[%c0_38, %c0_39] : memref<1x128xf32, #tpu.memory_space<vmem>>, vector<1x128xf32>
      %104 = vector.broadcast %103 : vector<1x128xf32> to vector<128x128xf32>
      %105 = arith.addf %102, %104 : vector<128x128xf32>
      %c0_40 = arith.constant 0 : index
      %c0_41 = arith.constant 0 : index
      %106 = vector.load %arg6[%c0_40, %c0_41] : memref<128x128xf32, #tpu.memory_space<vmem>>, vector<128x128xf32>
      tpu.vector_store %arg6[%c0_40, %c0_41], %105 {strides = array<i32>} : memref<128x128xf32, #tpu.memory_space<vmem>>, vector<128x128xf32>,
    } else {
    }
    %c16_i32 = arith.constant 16 : i32
    %3 = arith.muli %arg0, %c16_i32 : i32
    %c0_i32_1 = arith.constant 0 : i32
    %4 = arith.addi %3, %c0_i32_1 : i32
    %5 = arith.index_cast %4 : i32 to index
    %6 = memref.load %arg1[%5] : memref<16xi32, #tpu.memory_space<smem>>
    %7 = arith.index_cast %6 : i32 to index
    %c0 = arith.constant 0 : index
    %8 = vector.load %arg6[%7, %c0] : memref<128x128xf32, #tpu.memory_space<vmem>>, vector<1x128xf32>
    %c0_2 = arith.constant 0 : index
    %c0_3 = arith.constant 0 : index
    %9 = vector.load %arg5[%c0_2, %c0_3] : memref<16x128xf32, #tpu.memory_space<vmem>>, vector<1x128xf32>
    tpu.vector_store %arg5[%c0_2, %c0_3], %8 {strides = array<i32>} : memref<16x128xf32, #tpu.memory_space<vmem>>, vector<1x128xf32>,
    %c1_i32 = arith.constant 1 : i32
    %10 = arith.addi %3, %c1_i32 : i32
    %11 = arith.index_cast %10 : i32 to index
    %12 = memref.load %arg1[%11] : memref<16xi32, #tpu.memory_space<smem>>
    %13 = arith.index_cast %12 : i32 to index
    %c0_4 = arith.constant 0 : index
    %14 = vector.load %arg6[%13, %c0_4] : memref<128x128xf32, #tpu.memory_space<vmem>>, vector<1x128xf32>
    %c1 = arith.constant 1 : index
    %c0_5 = arith.constant 0 : index
    %15 = vector.load %arg5[%c1, %c0_5] : memref<16x128xf32, #tpu.memory_space<vmem>>, vector<1x128xf32>
    tpu.vector_store %arg5[%c1, %c0_5], %14 {strides = array<i32>} : memref<16x128xf32, #tpu.memory_space<vmem>>, vector<1x128xf32>,
    %c2_i32 = arith.constant 2 : i32
    %16 = arith.addi %3, %c2_i32 : i32
    %17 = arith.index_cast %16 : i32 to index
    %18 = memref.load %arg1[%17] : memref<16xi32, #tpu.memory_space<smem>>
    %19 = arith.index_cast %18 : i32 to index
    %c0_6 = arith.constant 0 : index
    %20 = vector.load %arg6[%19, %c0_6] : memref<128x128xf32, #tpu.memory_space<vmem>>, vector<1x128xf32>
    %c2 = arith.constant 2 : index
    %c0_7 = arith.constant 0 : index
    %21 = vector.load %arg5[%c2, %c0_7] : memref<16x128xf32, #tpu.memory_space<vmem>>, vector<1x128xf32>
    tpu.vector_store %arg5[%c2, %c0_7], %20 {strides = array<i32>} : memref<16x128xf32, #tpu.memory_space<vmem>>, vector<1x128xf32>,
    %c3_i32 = arith.constant 3 : i32
    %22 = arith.addi %3, %c3_i32 : i32
    %23 = arith.index_cast %22 : i32 to index
    %24 = memref.load %arg1[%23] : memref<16xi32, #tpu.memory_space<smem>>
    %25 = arith.index_cast %24 : i32 to index
    %c0_8 = arith.constant 0 : index
    %26 = vector.load %arg6[%25, %c0_8] : memref<128x128xf32, #tpu.memory_space<vmem>>, vector<1x128xf32>
    %c3 = arith.constant 3 : index
    %c0_9 = arith.constant 0 : index
    %27 = vector.load %arg5[%c3, %c0_9] : memref<16x128xf32, #tpu.memory_space<vmem>>, vector<1x128xf32>
    tpu.vector_store %arg5[%c3, %c0_9], %26 {strides = array<i32>} : memref<16x128xf32, #tpu.memory_space<vmem>>, vector<1x128xf32>,
    %c4_i32 = arith.constant 4 : i32
    %28 = arith.addi %3, %c4_i32 : i32
    %29 = arith.index_cast %28 : i32 to index
    %30 = memref.load %arg1[%29] : memref<16xi32, #tpu.memory_space<smem>>
    %31 = arith.index_cast %30 : i32 to index
    %c0_10 = arith.constant 0 : index
    %32 = vector.load %arg6[%31, %c0_10] : memref<128x128xf32, #tpu.memory_space<vmem>>, vector<1x128xf32>
    %c4 = arith.constant 4 : index
    %c0_11 = arith.constant 0 : index
    %33 = vector.load %arg5[%c4, %c0_11] : memref<16x128xf32, #tpu.memory_space<vmem>>, vector<1x128xf32>
    tpu.vector_store %arg5[%c4, %c0_11], %32 {strides = array<i32>} : memref<16x128xf32, #tpu.memory_space<vmem>>, vector<1x128xf32>,
    %c5_i32 = arith.constant 5 : i32
    %34 = arith.addi %3, %c5_i32 : i32
    %35 = arith.index_cast %34 : i32 to index
    %36 = memref.load %arg1[%35] : memref<16xi32, #tpu.memory_space<smem>>
    %37 = arith.index_cast %36 : i32 to index
    %c0_12 = arith.constant 0 : index
    %38 = vector.load %arg6[%37, %c0_12] : memref<128x128xf32, #tpu.memory_space<vmem>>, vector<1x128xf32>
    %c5 = arith.constant 5 : index
    %c0_13 = arith.constant 0 : index
    %39 = vector.load %arg5[%c5, %c0_13] : memref<16x128xf32, #tpu.memory_space<vmem>>, vector<1x128xf32>
    tpu.vector_store %arg5[%c5, %c0_13], %38 {strides = array<i32>} : memref<16x128xf32, #tpu.memory_space<vmem>>, vector<1x128xf32>,
    %c6_i32 = arith.constant 6 : i32
    %40 = arith.addi %3, %c6_i32 : i32
    %41 = arith.index_cast %40 : i32 to index
    %42 = memref.load %arg1[%41] : memref<16xi32, #tpu.memory_space<smem>>
    %43 = arith.index_cast %42 : i32 to index
    %c0_14 = arith.constant 0 : index
    %44 = vector.load %arg6[%43, %c0_14] : memref<128x128xf32, #tpu.memory_space<vmem>>, vector<1x128xf32>
    %c6 = arith.constant 6 : index
    %c0_15 = arith.constant 0 : index
    %45 = vector.load %arg5[%c6, %c0_15] : memref<16x128xf32, #tpu.memory_space<vmem>>, vector<1x128xf32>
    tpu.vector_store %arg5[%c6, %c0_15], %44 {strides = array<i32>} : memref<16x128xf32, #tpu.memory_space<vmem>>, vector<1x128xf32>,
    %c7_i32 = arith.constant 7 : i32
    %46 = arith.addi %3, %c7_i32 : i32
    %47 = arith.index_cast %46 : i32 to index
    %48 = memref.load %arg1[%47] : memref<16xi32, #tpu.memory_space<smem>>
    %49 = arith.index_cast %48 : i32 to index
    %c0_16 = arith.constant 0 : index
    %50 = vector.load %arg6[%49, %c0_16] : memref<128x128xf32, #tpu.memory_space<vmem>>, vector<1x128xf32>
    %c7 = arith.constant 7 : index
    %c0_17 = arith.constant 0 : index
    %51 = vector.load %arg5[%c7, %c0_17] : memref<16x128xf32, #tpu.memory_space<vmem>>, vector<1x128xf32>
    tpu.vector_store %arg5[%c7, %c0_17], %50 {strides = array<i32>} : memref<16x128xf32, #tpu.memory_space<vmem>>, vector<1x128xf32>,
    %c8_i32 = arith.constant 8 : i32
    %52 = arith.addi %3, %c8_i32 : i32
    %53 = arith.index_cast %52 : i32 to index
    %54 = memref.load %arg1[%53] : memref<16xi32, #tpu.memory_space<smem>>
    %55 = arith.index_cast %54 : i32 to index
    %c0_18 = arith.constant 0 : index
    %56 = vector.load %arg6[%55, %c0_18] : memref<128x128xf32, #tpu.memory_space<vmem>>, vector<1x128xf32>
    %c8 = arith.constant 8 : index
    %c0_19 = arith.constant 0 : index
    %57 = vector.load %arg5[%c8, %c0_19] : memref<16x128xf32, #tpu.memory_space<vmem>>, vector<1x128xf32>
    tpu.vector_store %arg5[%c8, %c0_19], %56 {strides = array<i32>} : memref<16x128xf32, #tpu.memory_space<vmem>>, vector<1x128xf32>,
    %c9_i32 = arith.constant 9 : i32
    %58 = arith.addi %3, %c9_i32 : i32
    %59 = arith.index_cast %58 : i32 to index
    %60 = memref.load %arg1[%59] : memref<16xi32, #tpu.memory_space<smem>>
    %61 = arith.index_cast %60 : i32 to index
    %c0_20 = arith.constant 0 : index
    %62 = vector.load %arg6[%61, %c0_20] : memref<128x128xf32, #tpu.memory_space<vmem>>, vector<1x128xf32>
    %c9 = arith.constant 9 : index
    %c0_21 = arith.constant 0 : index
    %63 = vector.load %arg5[%c9, %c0_21] : memref<16x128xf32, #tpu.memory_space<vmem>>, vector<1x128xf32>
    tpu.vector_store %arg5[%c9, %c0_21], %62 {strides = array<i32>} : memref<16x128xf32, #tpu.memory_space<vmem>>, vector<1x128xf32>,
    %c10_i32 = arith.constant 10 : i32
    %64 = arith.addi %3, %c10_i32 : i32
    %65 = arith.index_cast %64 : i32 to index
    %66 = memref.load %arg1[%65] : memref<16xi32, #tpu.memory_space<smem>>
    %67 = arith.index_cast %66 : i32 to index
    %c0_22 = arith.constant 0 : index
    %68 = vector.load %arg6[%67, %c0_22] : memref<128x128xf32, #tpu.memory_space<vmem>>, vector<1x128xf32>
    %c10 = arith.constant 10 : index
    %c0_23 = arith.constant 0 : index
    %69 = vector.load %arg5[%c10, %c0_23] : memref<16x128xf32, #tpu.memory_space<vmem>>, vector<1x128xf32>
    tpu.vector_store %arg5[%c10, %c0_23], %68 {strides = array<i32>} : memref<16x128xf32, #tpu.memory_space<vmem>>, vector<1x128xf32>,
    %c11_i32 = arith.constant 11 : i32
    %70 = arith.addi %3, %c11_i32 : i32
    %71 = arith.index_cast %70 : i32 to index
    %72 = memref.load %arg1[%71] : memref<16xi32, #tpu.memory_space<smem>>
    %73 = arith.index_cast %72 : i32 to index
    %c0_24 = arith.constant 0 : index
    %74 = vector.load %arg6[%73, %c0_24] : memref<128x128xf32, #tpu.memory_space<vmem>>, vector<1x128xf32>
    %c11 = arith.constant 11 : index
    %c0_25 = arith.constant 0 : index
    %75 = vector.load %arg5[%c11, %c0_25] : memref<16x128xf32, #tpu.memory_space<vmem>>, vector<1x128xf32>
    tpu.vector_store %arg5[%c11, %c0_25], %74 {strides = array<i32>} : memref<16x128xf32, #tpu.memory_space<vmem>>, vector<1x128xf32>,
    %c12_i32 = arith.constant 12 : i32
    %76 = arith.addi %3, %c12_i32 : i32
    %77 = arith.index_cast %76 : i32 to index
    %78 = memref.load %arg1[%77] : memref<16xi32, #tpu.memory_space<smem>>
    %79 = arith.index_cast %78 : i32 to index
    %c0_26 = arith.constant 0 : index
    %80 = vector.load %arg6[%79, %c0_26] : memref<128x128xf32, #tpu.memory_space<vmem>>, vector<1x128xf32>
    %c12 = arith.constant 12 : index
    %c0_27 = arith.constant 0 : index
    %81 = vector.load %arg5[%c12, %c0_27] : memref<16x128xf32, #tpu.memory_space<vmem>>, vector<1x128xf32>
    tpu.vector_store %arg5[%c12, %c0_27], %80 {strides = array<i32>} : memref<16x128xf32, #tpu.memory_space<vmem>>, vector<1x128xf32>,
    %c13_i32 = arith.constant 13 : i32
    %82 = arith.addi %3, %c13_i32 : i32
    %83 = arith.index_cast %82 : i32 to index
    %84 = memref.load %arg1[%83] : memref<16xi32, #tpu.memory_space<smem>>
    %85 = arith.index_cast %84 : i32 to index
    %c0_28 = arith.constant 0 : index
    %86 = vector.load %arg6[%85, %c0_28] : memref<128x128xf32, #tpu.memory_space<vmem>>, vector<1x128xf32>
    %c13 = arith.constant 13 : index
    %c0_29 = arith.constant 0 : index
    %87 = vector.load %arg5[%c13, %c0_29] : memref<16x128xf32, #tpu.memory_space<vmem>>, vector<1x128xf32>
    tpu.vector_store %arg5[%c13, %c0_29], %86 {strides = array<i32>} : memref<16x128xf32, #tpu.memory_space<vmem>>, vector<1x128xf32>,
    %c14_i32 = arith.constant 14 : i32
    %88 = arith.addi %3, %c14_i32 : i32
    %89 = arith.index_cast %88 : i32 to index
    %90 = memref.load %arg1[%89] : memref<16xi32, #tpu.memory_space<smem>>
    %91 = arith.index_cast %90 : i32 to index
    %c0_30 = arith.constant 0 : index
    %92 = vector.load %arg6[%91, %c0_30] : memref<128x128xf32, #tpu.memory_space<vmem>>, vector<1x128xf32>
    %c14 = arith.constant 14 : index
    %c0_31 = arith.constant 0 : index
    %93 = vector.load %arg5[%c14, %c0_31] : memref<16x128xf32, #tpu.memory_space<vmem>>, vector<1x128xf32>
    tpu.vector_store %arg5[%c14, %c0_31], %92 {strides = array<i32>} : memref<16x128xf32, #tpu.memory_space<vmem>>, vector<1x128xf32>,
    %c15_i32 = arith.constant 15 : i32
    %94 = arith.addi %3, %c15_i32 : i32
    %95 = arith.index_cast %94 : i32 to index
    %96 = memref.load %arg1[%95] : memref<16xi32, #tpu.memory_space<smem>>
    %97 = arith.index_cast %96 : i32 to index
    %c0_32 = arith.constant 0 : index
    %98 = vector.load %arg6[%97, %c0_32] : memref<128x128xf32, #tpu.memory_space<vmem>>, vector<1x128xf32>
    %c15 = arith.constant 15 : index
    %c0_33 = arith.constant 0 : index
    %99 = vector.load %arg5[%c15, %c0_33] : memref<16x128xf32, #tpu.memory_space<vmem>>, vector<1x128xf32>
    tpu.vector_store %arg5[%c15, %c0_33], %98 {strides = array<i32>} : memref<16x128xf32, #tpu.memory_space<vmem>>, vector<1x128xf32>,
    return
  }
  func.func @transform_0(%arg0: i32, %arg1: memref<16xi32, #tpu.memory_space<smem>>) -> (i32, i32) {
    %c0_i32 = arith.constant 0 : i32
    %c0_i32_0 = arith.constant 0 : i32
    %c0_i32_1 = arith.constant 0 : i32
    return %c0_i32, %c0_i32_0 : i32, i32
  }
  func.func @transform_1(%arg0: i32, %arg1: memref<16xi32, #tpu.memory_space<smem>>) -> (i32, i32) {
    %c0_i32 = arith.constant 0 : i32
    %c0_i32_0 = arith.constant 0 : i32
    %c0_i32_1 = arith.constant 0 : i32
    return %c0_i32, %c0_i32_0 : i32, i32
  }
  func.func @transform_2(%arg0: i32, %arg1: memref<16xi32, #tpu.memory_space<smem>>) -> (i32, i32) {
    %c0_i32 = arith.constant 0 : i32
    %c0_i32_0 = arith.constant 0 : i32
    %c0_i32_1 = arith.constant 0 : i32
    return %c0_i32, %c0_i32_0 : i32, i32
  }
  func.func @transform_3(%arg0: i32, %arg1: memref<16xi32, #tpu.memory_space<smem>>) -> (i32, i32) {
    %c0_i32 = arith.constant 0 : i32
    %c0_i32_0 = arith.constant 0 : i32
    return %arg0, %c0_i32 : i32, i32
  }
}

</mosaic_0001>

<llo_original>
// kernel: bigram_forward.1
$region0: #{bigram_forward.1}
  #allocation0 [shape = 'u32[]', space=smem, size = 0x4, offset = 0x4, fixed_abs, tag = 'smem constant byte address 0x4 - core index']
  #allocation1 [shape = 'u32[144,128]{1,0:T(1,128)}', space=vmem, size = 0x12000, scoped, tag = 'internal scratch']
  #allocation2 [shape = 'f32[128,128]{1,0:T(8,128)}', space=vmem, size = 0x10000, scoped, tag = 'scratch operand']
  #allocation3 [shape = 's32[1]{0}', space=sflag, size = 0x4, scoped, tag = 'scoped memory for bigram_forward.1']
  #allocation4 [shape = 'u8[512]{0}', space=smem, size = 0x200, scoped, tag = 'prefetched SMEM operand 0']
  %s0 = inlined_call_operand.vmem [shape: s32[16], index: 0, kind: input, shape index: {}]
  %s1 = inlined_call_operand.vmem [shape: bf16[128,32], index: 1, kind: input, shape index: {}]
  %s2 = inlined_call_operand.vmem [shape: bf16[128,32], index: 2, kind: input, shape index: {}]
  %s3 = inlined_call_operand.vmem [shape: f32[1,128], index: 3, kind: input, shape index: {}]
  %s4 = inlined_call_operand.vmem [shape: f32[16,128], index: 4, kind: output, shape index: {}]
  %s5 = sld [smem:[#allocation0]]
  $region26: #{bigram_forward.1} parent=0
    _
  %s7 = ssub.s32 1, %s5
  %s8 = scalar_select 0, %s7, %s5
  %s9 = sshll.u32 %s0, 4
  %s10 = int_to_ptr.vmem [resolvable:$true] %s9
  %12 = dma.vmem_to_smem %s10, 16, [#allocation4], [#allocation3]
  %13 = dma.done [#allocation3], 16
  %14 = sfence
  // Predicated region
  $region2: #{bigram_forward.1} parent=0 // pred_check
    _
  $region3: #{bigram_forward.1} parent=0 // pred_check_branch
    %16 = sbr.rel (0) target = $region5
  $region4: #{bigram_forward.1} parent=0 // pred_region
    _
  $region5: #{bigram_forward.1} parent=0 // pred_fallthru
    _
  // Predicated region
  $region6: #{bigram_forward.1} parent=0 // pred_check
    _
  $region7: #{bigram_forward.1} parent=0 // pred_check_branch
    %18 = sbr.rel (0) target = $region9
  $region8: #{bigram_forward.1} parent=0 // pred_region
    _
  $region9: #{bigram_forward.1} parent=0 // pred_fallthru
    _
  // Predicated region
  $region10: #{bigram_forward.1} parent=0 // pred_check
    _
  $region11: #{bigram_forward.1} parent=0 // pred_check_branch
    %20 = sbr.rel (0) target = $region13
  $region12: #{bigram_forward.1} parent=0 // pred_region
    _
  $region13: #{bigram_forward.1} parent=0 // pred_fallthru
    _
  %p22 = scmp.eq.s32.totalorder 0, 0
  // Predicated region
  $region14: #{bigram_forward.1} parent=0 // pred_check
    %p23 = pneg %p22
  $region15: #{bigram_forward.1} parent=0 // pred_check_branch
    %25 = sbr.rel (%p23) target = $region17
  $region16: #{bigram_forward.1} parent=0 // pred_region
    %v26 = vld [vmem:[%s1] sm:$0xf]
    %v27 = vld [vmem:[%s1 + $0x4] sm:$0xf]
    %v28 = vld [vmem:[%s1 + $0x8] sm:$0xf]
    %v29 = vld [vmem:[%s1 + $0xc] sm:$0xf]
    %v30 = vld [vmem:[%s1 + $0x10] sm:$0xf]
    %v31 = vld [vmem:[%s1 + $0x14] sm:$0xf]
    %v32 = vld [vmem:[%s1 + $0x18] sm:$0xf]
    %v33 = vld [vmem:[%s1 + $0x1c] sm:$0xf]
    %v34 = vld [vmem:[%s1 + $0x20] sm:$0xf]
    %v35 = vld [vmem:[%s1 + $0x24] sm:$0xf]
    %v36 = vld [vmem:[%s1 + $0x28] sm:$0xf]
    %v37 = vld [vmem:[%s1 + $0x2c] sm:$0xf]
    %v38 = vld [vmem:[%s1 + $0x30] sm:$0xf]
    %v39 = vld [vmem:[%s1 + $0x34] sm:$0xf]
    %v40 = vld [vmem:[%s1 + $0x38] sm:$0xf]
    %v41 = vld [vmem:[%s1 + $0x3c] sm:$0xf]
    %v42 = vld [vmem:[%s2] sm:$0xf]
    %v43 = vld [vmem:[%s2 + $0x4] sm:$0xf]
    %v44 = vld [vmem:[%s2 + $0x8] sm:$0xf]
    %v45 = vld [vmem:[%s2 + $0xc] sm:$0xf]
    %v46 = vld [vmem:[%s2 + $0x10] sm:$0xf]
    %v47 = vld [vmem:[%s2 + $0x14] sm:$0xf]
    %v48 = vld [vmem:[%s2 + $0x18] sm:$0xf]
    %v49 = vld [vmem:[%s2 + $0x1c] sm:$0xf]
    %v50 = vld [vmem:[%s2 + $0x20] sm:$0xf]
    %v51 = vld [vmem:[%s2 + $0x24] sm:$0xf]
    %v52 = vld [vmem:[%s2 + $0x28] sm:$0xf]
    %v53 = vld [vmem:[%s2 + $0x2c] sm:$0xf]
    %v54 = vld [vmem:[%s2 + $0x30] sm:$0xf]
    %v55 = vld [vmem:[%s2 + $0x34] sm:$0xf]
    %v56 = vld [vmem:[%s2 + $0x38] sm:$0xf]
    %v57 = vld [vmem:[%s2 + $0x3c] sm:$0xf]
    %v58 = vld [vmem:[%s3] sm:$0x1]
    %v60 = vlaneseq
    %v61 = vshrl.u32 %v60, 7
    %v62 = vsub.s32 0, %v61
    %v63 = vrot.slane %v58, %v62
    %v81 = vunpack.c.l.b16 %v26
    %v82 = vunpack.c.l.b16 %v27
    %v83 = vunpack.c.l.b16 %v28
    %v84 = vunpack.c.l.b16 %v29
    %v85 = vunpack.c.l.b16 %v30
    %v86 = vunpack.c.l.b16 %v31
    %v87 = vunpack.c.l.b16 %v32
    %v88 = vunpack.c.l.b16 %v33
    %v89 = vunpack.c.l.b16 %v34
    %v90 = vunpack.c.l.b16 %v35
    %v91 = vunpack.c.l.b16 %v36
    %v92 = vunpack.c.l.b16 %v37
    %v93 = vunpack.c.l.b16 %v38
    %v94 = vunpack.c.l.b16 %v39
    %v95 = vunpack.c.l.b16 %v40
    %v96 = vunpack.c.l.b16 %v41
    %v97 = vpack.c.b16 %v82, %v81
    %v98 = vpack.c.b16 %v84, %v83
    %v99 = vpack.c.b16 %v86, %v85
    %v100 = vpack.c.b16 %v88, %v87
    %v101 = vpack.c.b16 %v90, %v89
    %v102 = vpack.c.b16 %v92, %v91
    %v103 = vpack.c.b16 %v94, %v93
    %v104 = vpack.c.b16 %v96, %v95
    %v121 = vunpack.c.l.b16 %v42
    %v122 = vunpack.c.l.b16 %v43
    %v123 = vunpack.c.l.b16 %v44
    %v124 = vunpack.c.l.b16 %v45
    %v125 = vunpack.c.l.b16 %v46
    %v126 = vunpack.c.l.b16 %v47
    %v127 = vunpack.c.l.b16 %v48
    %v128 = vunpack.c.l.b16 %v49
    %v129 = vunpack.c.l.b16 %v50
    %v130 = vunpack.c.l.b16 %v51
    %v131 = vunpack.c.l.b16 %v52
    %v132 = vunpack.c.l.b16 %v53
    %v133 = vunpack.c.l.b16 %v54
    %v134 = vunpack.c.l.b16 %v55
    %v135 = vunpack.c.l.b16 %v56
    %v136 = vunpack.c.l.b16 %v57
    %v137 = vpack.c.b16 %v122, %v121
    %v138 = vpack.c.b16 %v124, %v123
    %v139 = vpack.c.b16 %v126, %v125
    %v140 = vpack.c.b16 %v128, %v127
    %v141 = vpack.c.b16 %v130, %v129
    %v142 = vpack.c.b16 %v132, %v131
    %v143 = vpack.c.b16 %v134, %v133
    %v144 = vpack.c.b16 %v136, %v135
    %vm145 = vcmask 261120
    %v147 = vsel %vm145, %v97, 0
    %v150 = vsel %vm145, %v98, 0
    %v153 = vsel %vm145, %v99, 0
    %v156 = vsel %vm145, %v100, 0
    %v159 = vsel %vm145, %v101, 0
    %v162 = vsel %vm145, %v102, 0
    %v165 = vsel %vm145, %v103, 0
    %v168 = vsel %vm145, %v104, 0
    %v171 = vsel %vm145, %v137, 0
    %v174 = vsel %vm145, %v138, 0
    %v177 = vsel %vm145, %v139, 0
    %v180 = vsel %vm145, %v140, 0
    %v183 = vsel %vm145, %v141, 0
    %v186 = vsel %vm145, %v142, 0
    %v189 = vsel %vm145, %v143, 0
    %v192 = vsel %vm145, %v144, 0
    %194 = vmatprep.subr.bf16.mxu0 0
    %195 = vmatpush1.bf16.xpose.msra.mxu0 %v192
    %196 = vmatprep.subr.bf16.mxu0 0
    %197 = vmatpush1.bf16.xpose.msra.mxu0 %v189
    %198 = vmatprep.subr.bf16.mxu0 0
    %199 = vmatpush1.bf16.xpose.msra.mxu0 %v186
    %200 = vmatprep.subr.bf16.mxu0 0
    %201 = vmatpush1.bf16.xpose.msra.mxu0 %v183
    %202 = vmatprep.subr.bf16.mxu0 0
    %203 = vmatpush1.bf16.xpose.msra.mxu0 %v180
    %204 = vmatprep.subr.bf16.mxu0 0
    %205 = vmatpush1.bf16.xpose.msra.mxu0 %v177
    %206 = vmatprep.subr.bf16.mxu0 0
    %207 = vmatpush1.bf16.xpose.msra.mxu0 %v174
    %208 = vmatprep.subr.bf16.mxu0 0
    %209 = vmatpush1.bf16.xpose.msra.mxu0 %v171
    %210 = vmatprep.subr.bf16.mxu0 0
    %211 = vmatpush2.bf16.xpose.msra.mxu0 0
    %212 = vmatprep.subr.bf16.mxu0 0
    %213 = vmatpush2.bf16.xpose.msra.mxu0 0
    %214 = vmatprep.subr.bf16.mxu0 0
    %215 = vmatpush2.bf16.xpose.msra.mxu0 0
    %216 = vmatprep.subr.bf16.mxu0 0
    %217 = vmatpush2.bf16.xpose.msra.mxu0 0
    %218 = vmatprep.subr.bf16.mxu0 0
    %219 = vmatpush2.bf16.xpose.msra.mxu0 0
    %220 = vmatprep.subr.bf16.mxu0 0
    %221 = vmatpush2.bf16.xpose.msra.mxu0 0
    %222 = vmatprep.subr.bf16.mxu0 0
    %223 = vmatpush2.bf16.xpose.msra.mxu0 0
    %224 = vmatprep.subr.bf16.mxu0 0
    %225 = vmatpush2.bf16.xpose.msra.mxu0 0
    %226 = vmatprep.mubr.bf16.mxu0 0
    %227 = vmatmul.mubr.bf16.gmra.mxu0 %v147
    %v228 = vpop.f32.mrf.mxu0
    %v229 = vadd.f32 %v63, %v228
    %v230 = vpop.f32.mrf.mxu0
    %v231 = vpop.f32.mrf.mxu0
    %v232 = vadd.f32 %v63, %v231
    %v233 = vpop.f32.mrf.mxu0
    %234 = vmatprep.mubr.bf16.mxu0 0
    %235 = vmatmul.mubr.bf16.gmra.mxu0 %v150
    %v236 = vpop.f32.mrf.mxu0
    %v237 = vadd.f32 %v63, %v236
    %v238 = vpop.f32.mrf.mxu0
    %v239 = vpop.f32.mrf.mxu0
    %v240 = vadd.f32 %v63, %v239
    %v241 = vpop.f32.mrf.mxu0
    %242 = vmatprep.mubr.bf16.mxu0 0
    %243 = vmatmul.mubr.bf16.gmra.mxu0 %v153
    %v244 = vpop.f32.mrf.mxu0
    %v245 = vadd.f32 %v63, %v244
    %v246 = vpop.f32.mrf.mxu0
    %v247 = vpop.f32.mrf.mxu0
    %v248 = vadd.f32 %v63, %v247
    %v249 = vpop.f32.mrf.mxu0
    %250 = vmatprep.mubr.bf16.mxu0 0
    %251 = vmatmul.mubr.bf16.gmra.mxu0 %v156
    %v252 = vpop.f32.mrf.mxu0
    %v253 = vadd.f32 %v63, %v252
    %v254 = vpop.f32.mrf.mxu0
    %v255 = vpop.f32.mrf.mxu0
    %v256 = vadd.f32 %v63, %v255
    %v257 = vpop.f32.mrf.mxu0
    %258 = vmatprep.mubr.bf16.mxu0 0
    %259 = vmatmul.mubr.bf16.gmra.mxu0 %v159
    %v260 = vpop.f32.mrf.mxu0
    %v261 = vadd.f32 %v63, %v260
    %v262 = vpop.f32.mrf.mxu0
    %v263 = vpop.f32.mrf.mxu0
    %v264 = vadd.f32 %v63, %v263
    %v265 = vpop.f32.mrf.mxu0
    %266 = vmatprep.mubr.bf16.mxu0 0
    %267 = vmatmul.mubr.bf16.gmra.mxu0 %v162
    %v268 = vpop.f32.mrf.mxu0
    %v269 = vadd.f32 %v63, %v268
    %v270 = vpop.f32.mrf.mxu0
    %v271 = vpop.f32.mrf.mxu0
    %v272 = vadd.f32 %v63, %v271
    %v273 = vpop.f32.mrf.mxu0
    %274 = vmatprep.mubr.bf16.mxu0 0
    %275 = vmatmul.mubr.bf16.gmra.mxu0 %v165
    %v276 = vpop.f32.mrf.mxu0
    %v277 = vadd.f32 %v63, %v276
    %v278 = vpop.f32.mrf.mxu0
    %v279 = vpop.f32.mrf.mxu0
    %v280 = vadd.f32 %v63, %v279
    %v281 = vpop.f32.mrf.mxu0
    %282 = vmatprep.mubr.bf16.mxu0 0
    %283 = vmatmul.mubr.bf16.gmra.mxu0 %v168
    %v284 = vpop.f32.mrf.mxu0
    %v285 = vadd.f32 %v63, %v284
    %v286 = vpop.f32.mrf.mxu0
    %v287 = vpop.f32.mrf.mxu0
    %v288 = vadd.f32 %v63, %v287
    %v289 = vpop.f32.mrf.mxu0
    %290 = vdwg.mxu0
    %291 = vst [vmem:[#allocation2] sm:$0xff] %v229
    %292 = vst [vmem:[#allocation2 + $0x8] sm:$0xff] %v232
    %293 = vst [vmem:[#allocation2 + $0x10] sm:$0xff] %v237
    %294 = vst [vmem:[#allocation2 + $0x18] sm:$0xff] %v240
    %295 = vst [vmem:[#allocation2 + $0x20] sm:$0xff] %v245
    %296 = vst [vmem:[#allocation2 + $0x28] sm:$0xff] %v248
    %297 = vst [vmem:[#allocation2 + $0x30] sm:$0xff] %v253
    %298 = vst [vmem:[#allocation2 + $0x38] sm:$0xff] %v256
    %299 = vst [vmem:[#allocation2 + $0x40] sm:$0xff] %v261
    %300 = vst [vmem:[#allocation2 + $0x48] sm:$0xff] %v264
    %301 = vst [vmem:[#allocation2 + $0x50] sm:$0xff] %v269
    %302 = vst [vmem:[#allocation2 + $0x58] sm:$0xff] %v272
    %303 = vst [vmem:[#allocation2 + $0x60] sm:$0xff] %v277
    %304 = vst [vmem:[#allocation2 + $0x68] sm:$0xff] %v280
    %305 = vst [vmem:[#allocation2 + $0x70] sm:$0xff] %v285
    %306 = vst [vmem:[#allocation2 + $0x78] sm:$0xff] %v288
  $region17: #{bigram_forward.1} parent=0 // pred_fallthru
    _
  %s307 = smul.u32 0, 16
  %s308 = sld [smem:[#allocation4 + %s307]]
  %s309 = scalar_lea.vmem [#allocation2], %s308
  %v310 = vld [vmem:[%s309] sm:$0x1]
  %311 = vst [vmem:[%s4] sm:$0x1] %v310
  %s312 = sadd.s32 %s307, 1
  %s313 = sld [smem:[#allocation4 + %s312]]
  %s314 = scalar_lea.vmem [#allocation2], %s313
  %v315 = vld [vmem:[%s314] sm:$0x1]
  %316 = vst [vmem:[%s4 + $0x1] sm:$0x1] %v315
  %s317 = sadd.s32 %s307, 2
  %s318 = sld [smem:[#allocation4 + %s317]]
  %s319 = scalar_lea.vmem [#allocation2], %s318
  %v320 = vld [vmem:[%s319] sm:$0x1]
  %321 = vst [vmem:[%s4 + $0x2] sm:$0x1] %v320
  %s322 = sadd.s32 %s307, 3
  %s323 = sld [smem:[#allocation4 + %s322]]
  %s324 = scalar_lea.vmem [#allocation2], %s323
  %v325 = vld [vmem:[%s324] sm:$0x1]
  %326 = vst [vmem:[%s4 + $0x3] sm:$0x1] %v325
  %s327 = sadd.s32 %s307, 4
  %s328 = sld [smem:[#allocation4 + %s327]]
  %s329 = scalar_lea.vmem [#allocation2], %s328
  %v330 = vld [vmem:[%s329] sm:$0x1]
  %331 = vst [vmem:[%s4 + $0x4] sm:$0x1] %v330
  %s332 = sadd.s32 %s307, 5
  %s333 = sld [smem:[#allocation4 + %s332]]
  %s334 = scalar_lea.vmem [#allocation2], %s333
  %v335 = vld [vmem:[%s334] sm:$0x1]
  %336 = vst [vmem:[%s4 + $0x5] sm:$0x1] %v335
  %s337 = sadd.s32 %s307, 6
  %s338 = sld [smem:[#allocation4 + %s337]]
  %s339 = scalar_lea.vmem [#allocation2], %s338
  %v340 = vld [vmem:[%s339] sm:$0x1]
  %341 = vst [vmem:[%s4 + $0x6] sm:$0x1] %v340
  %s342 = sadd.s32 %s307, 7
  %s343 = sld [smem:[#allocation4 + %s342]]
  %s344 = scalar_lea.vmem [#allocation2], %s343
  %v345 = vld [vmem:[%s344] sm:$0x1]
  %346 = vst [vmem:[%s4 + $0x7] sm:$0x1] %v345
  %s347 = sadd.s32 %s307, 8
  %s348 = sld [smem:[#allocation4 + %s347]]
  %s349 = scalar_lea.vmem [#allocation2], %s348
  %v350 = vld [vmem:[%s349] sm:$0x1]
  %351 = vst [vmem:[%s4 + $0x8] sm:$0x1] %v350
  %s352 = sadd.s32 %s307, 9
  %s353 = sld [smem:[#allocation4 + %s352]]
  %s354 = scalar_lea.vmem [#allocation2], %s353
  %v355 = vld [vmem:[%s354] sm:$0x1]
  %356 = vst [vmem:[%s4 + $0x9] sm:$0x1] %v355
  %s357 = sadd.s32 %s307, 10
  %s358 = sld [smem:[#allocation4 + %s357]]
  %s359 = scalar_lea.vmem [#allocation2], %s358
  %v360 = vld [vmem:[%s359] sm:$0x1]
  %361 = vst [vmem:[%s4 + $0xa] sm:$0x1] %v360
  %s362 = sadd.s32 %s307, 11
  %s363 = sld [smem:[#allocation4 + %s362]]
  %s364 = scalar_lea.vmem [#allocation2], %s363
  %v365 = vld [vmem:[%s364] sm:$0x1]
  %366 = vst [vmem:[%s4 + $0xb] sm:$0x1] %v365
  %s367 = sadd.s32 %s307, 12
  %s368 = sld [smem:[#allocation4 + %s367]]
  %s369 = scalar_lea.vmem [#allocation2], %s368
  %v370 = vld [vmem:[%s369] sm:$0x1]
  %371 = vst [vmem:[%s4 + $0xc] sm:$0x1] %v370
  %s372 = sadd.s32 %s307, 13
  %s373 = sld [smem:[#allocation4 + %s372]]
  %s374 = scalar_lea.vmem [#allocation2], %s373
  %v375 = vld [vmem:[%s374] sm:$0x1]
  %376 = vst [vmem:[%s4 + $0xd] sm:$0x1] %v375
  %s377 = sadd.s32 %s307, 14
  %s378 = sld [smem:[#allocation4 + %s377]]
  %s379 = scalar_lea.vmem [#allocation2], %s378
  %v380 = vld [vmem:[%s379] sm:$0x1]
  %381 = vst [vmem:[%s4 + $0xe] sm:$0x1] %v380
  %s382 = sadd.s32 %s307, 15
  %s383 = sld [smem:[#allocation4 + %s382]]
  %s384 = scalar_lea.vmem [#allocation2], %s383
  %v385 = vld [vmem:[%s384] sm:$0x1]
  %386 = vst [vmem:[%s4 + $0xf] sm:$0x1] %v385
  // Predicated region
  $region18: #{bigram_forward.1} parent=0 // pred_check
    _
  $region19: #{bigram_forward.1} parent=0 // pred_check_branch
    %388 = sbr.rel (0) target = $region21
  $region20: #{bigram_forward.1} parent=0 // pred_region
    _
  $region21: #{bigram_forward.1} parent=0 // pred_fallthru
    _
  // Predicated region
  $region22: #{bigram_forward.1} parent=0 // pred_check
    _
  $region23: #{bigram_forward.1} parent=0 // pred_check_branch
    %390 = sbr.rel (0) target = $region25
  $region24: #{bigram_forward.1} parent=0 // pred_region
    _
  $region25: #{bigram_forward.1} parent=0 // pred_fallthru
    _

</llo_original>
